<compile_context>
chip_gen: v7x
topology: tpu7x:2x2x1
jax: 0.10.0
libtpu: 0.0.40
codegen_flags: <defaults>
</compile_context>

<pallas_src>
import functools

import jax
import jax.numpy as jnp
from jax.experimental import pallas as pl
from jax.experimental.pallas import tpu as pltpu


def _ensemble_kernel(patches_ref, w1_ref, b1_ref, w2_ref, b2_ref, ind_ref,
                     *, L, NCp, imgs, HW, inv_hw):
    """One grid step = one tile of whole images, all learners folded into matmul N."""
    # conv-as-matmul, learners folded into N: (rows, CK) @ (CK, LFp) -> (rows, LFp), f32 acc
    h = jnp.dot(patches_ref[...], w1_ref[...], preferred_element_type=jnp.float32)
    h = jnp.maximum(h + b1_ref[...], 0.0)                                   # bias + ReLU, f32

    # global average pool as a grouped sublane reduce (XLU), f32 throughout:
    # (imgs*HW, LFp) -> (imgs, HW, LFp) -> sum over HW.  No extra MXU pass, no bf16 cast
    # of the full activation, no pool_ones operand.  (HW % 8 == 0 keeps the reshape free.)
    pooled = jnp.sum(h.reshape(imgs, HW, h.shape[-1]), axis=1) * inv_hw     # (imgs, LFp)

    # all FC heads at once via the block-diagonal weight slab:
    # (imgs, LFp) @ (LFp, L*NCp) -> (imgs, L*NCp); padded class columns carry bias -1e30.
    logits = jnp.dot(pooled.astype(jnp.bfloat16), w2_ref[...],
                     preferred_element_type=jnp.float32) + b2_ref[...]

    # per-learner softmax over its own 128-lane-aligned NCp block (padding -> exp == 0).
    # Exact divide: the denominator is only (imgs, 1), so it is free and keeps the
    # per-learner probabilities normalized exactly.
    for l in range(L):                                                      # L small, static
        z = logits[:, l * NCp:(l + 1) * NCp]
        m = jnp.max(z, axis=-1, keepdims=True)
        e = jnp.exp(z - m)
        ind_ref[:, l, :] = e / jnp.sum(e, axis=-1, keepdims=True)           # (imgs, NCp)


def _vmem_budget():
    """Per-generation VMEM budget: (working-set budget, vmem_limit_bytes)."""
    try:
        cap = pltpu.get_tpu_info().vmem_capacity_bytes
    except Exception:
        cap = 64 * 1024 * 1024               # conservative default: v7x per-TC VMEM
    vmem_limit = min(cap // 2, 64 * 1024 * 1024)   # v7x -> 32 MiB, v5e/v6e -> 64 MiB
    budget = (vmem_limit * 4) // 5                 # ~80% of the scoped limit for our buffers
    return budget, vmem_limit


def _tile_vmem_bytes(d, HW, CK, LFp, LNCp, L, NCp):
    """Working-set estimate for a tile of d whole images (f32 activation h dominates)."""
    tile_rows = d * HW
    patches = 2 * tile_rows * CK * 2                 # bf16 patch tile, double-buffered
    h_f32 = tile_rows * LFp * 4                      # conv activation (dominant term)
    pooled = d * LFp * 4
    logits = 2 * d * LNCp * 4                        # logits + softmax temporaries
    out = 2 * d * L * NCp * 4                        # output tile, double-buffered
    weights = 2 * (CK * LFp * 2 + LFp * 4 + LFp * LNCp * 2 + LNCp * 4)   # grid-invariant
    slack = 1 << 20                                  # relayout / epilogue headroom
    return patches + h_f32 + pooled + logits + out + weights + slack


def _pick_imgs_per_tile(B, HW, CK, LFp, LNCp, L, NCp, budget_bytes):
    """Largest whole-image tile that fits the VMEM budget, preferring >= 2 grid steps so
    both v7x TensorCores get work on the 'parallel' axis."""
    divs = [d for d in range(1, B + 1) if B % d == 0]
    legal = [d for d in divs if d == B or (d * HW) % 8 == 0]   # (8,128) rule on patch rows
    fitting = [d for d in legal
               if _tile_vmem_bytes(d, HW, CK, LFp, LNCp, L, NCp) <= budget_bytes]
    if not fitting:
        # TODO(synk): sub-image row tiling with a pooled-sum scratch accumulator
        # ("arbitrary" grid axis) for configs where even one image's activation
        # does not fit the budget; for now fall back to the smallest legal tile.
        return min(legal)
    multi = [d for d in fitting if d <= B // 2]      # guarantees grid >= 2 steps (megacore)
    return max(multi) if multi else max(fitting)


def ensemble_forward(x, w1, b1, w2, b2):
    """x:  (B, C, H, W) NCHW float32.
    w1: (L, 9*C, F)  flattened 3x3 conv weights (row index = k_offset*C + c), pad=1, stride=1
    b1: (L, F)       conv bias
    w2: (L, F, NC)   FC weights
    b2: (L, NC)      FC bias
    Returns (ensemble_pred (B,1,NC), ind_pred (B,L,NC), convex_weights (B,L,NC)).
    """
    B, C, H, W = x.shape
    L, CK, F = w1.shape
    NC = w2.shape[-1]
    HW = H * W
    LF = L * F
    LFp = ((LF + 127) // 128) * 128              # lane-dense hidden dim (zero padded)
    NCp = ((NC + 127) // 128) * 128              # lane-dense padded class dim per learner
    LNCp = L * NCp

    # --- glue: im2col in NHWC (only the original x gets transposed, not the 9x patches) ---
    # TODO(synk): for large B*H*W, move im2col into the kernel (DMA a padded NHWC image tile
    # via memory_space=pl.ANY and build the (rows, CK) patch slab in a VMEM scratch from 9
    # shifted slices) to cut HBM read traffic ~9x; kept host-side here because with tiny C
    # the shifted slices are lane-sparse and the in-kernel relayouts dominate.
    xn = jnp.transpose(x, (0, 2, 3, 1))                                     # (B, H, W, C)
    xp = jnp.pad(xn, ((0, 0), (1, 1), (1, 1), (0, 0)))
    patches = jnp.concatenate(
        [xp[:, i:i + H, j:j + W, :] for i in range(3) for j in range(3)], axis=-1)
    patches = patches.reshape(B * HW, CK).astype(jnp.bfloat16)              # rows (B,H,W)-major

    # fold learners into the matmul N dimension; zero-pad LF up to LFp lanes
    w1_cat = jnp.transpose(w1, (1, 0, 2)).reshape(CK, LF)
    w1_cat = jnp.pad(w1_cat, ((0, 0), (0, LFp - LF))).astype(jnp.bfloat16)
    b1_cat = jnp.pad(b1.reshape(1, LF), ((0, 0), (0, LFp - LF))).astype(jnp.float32)

    # block-diagonal FC weights, classes padded to NCp lanes per learner (pad bias = -1e30)
    # TODO(synk): for large L, don't materialize the L^2-sized block-diagonal slab; loop the
    # per-learner FC on pooled slices or run FC+softmax over all B rows in a second tiny call.
    w2_blk = jnp.zeros((LFp, LNCp), jnp.float32)
    b2_cat = jnp.full((1, LNCp), -1e30, jnp.float32)
    for l in range(L):
        w2_blk = w2_blk.at[l * F:(l + 1) * F, l * NCp:l * NCp + NC].set(w2[l])
        b2_cat = b2_cat.at[0, l * NCp:l * NCp + NC].set(b2[l])
    w2_blk = w2_blk.astype(jnp.bfloat16)

    budget, vmem_limit = _vmem_budget()
    imgs = _pick_imgs_per_tile(B, HW, CK, LFp, LNCp, L, NCp, budget)
    tile_rows = imgs * HW

    kernel = functools.partial(_ensemble_kernel, L=L, NCp=NCp, imgs=imgs, HW=HW,
                               inv_hw=1.0 / HW)

    # TODO(synk): grid-invariant operands (w1_cat, b1_cat, w2_blk, b2_cat) are fetched once
    # but still get default 2-deep buffers; pipeline_mode=pl.Buffered(1) on those specs
    # would reclaim that VMEM for larger row tiles when L*F is big (negligible here).
    ind_pad = pl.pallas_call(
        kernel,
        out_shape=jax.ShapeDtypeStruct((B, L, NCp), jnp.float32),
        grid_spec=pltpu.PrefetchScalarGridSpec(
            num_scalar_prefetch=0,
            grid=(B // imgs,),
            in_specs=[
                pl.BlockSpec((tile_rows, CK), lambda i: (i, 0)),   # patch row tile
                pl.BlockSpec((CK, LFp), lambda i: (0, 0)),         # folded conv weights
                pl.BlockSpec((1, LFp), lambda i: (0, 0)),          # conv biases (zero-padded)
                pl.BlockSpec((LFp, LNCp), lambda i: (0, 0)),       # block-diag FC weights
                pl.BlockSpec((1, LNCp), lambda i: (0, 0)),         # FC biases (+ -1e30 pads)
            ],
            out_specs=pl.BlockSpec((imgs, L, NCp), lambda i: (i, 0, 0)),
        ),
        compiler_params=pltpu.CompilerParams(
            dimension_semantics=("parallel",),          # no cross-step accumulation
            vmem_limit_bytes=vmem_limit),
    )(patches, w1_cat, b1_cat, w2_blk, b2_cat)

    ind_pred = ind_pad[:, :, :NC]                                           # (B, L, NC)
    # eval mode, drop_p = 0 -> binary_mask = ones -> convex_weights = 1/L everywhere
    ensemble_pred = jnp.mean(ind_pred, axis=1, keepdims=True)               # (B, 1, NC)
    convex_weights = jnp.full((B, L, NC), 1.0 / L, dtype=jnp.float32)
    return ensemble_pred, ind_pred, convex_weights


def _reference_forward(x, w1, b1, w2, b2):
    """Pure-JAX f32 reference with identical semantics (per-learner, no folding)."""
    B, C, H, W = x.shape
    L, CK, F = w1.shape
    xn = jnp.transpose(x, (0, 2, 3, 1))
    xp = jnp.pad(xn, ((0, 0), (1, 1), (1, 1), (0, 0)))
    patches = jnp.concatenate(
        [xp[:, i:i + H, j:j + W, :] for i in range(3) for j in range(3)], axis=-1)
    patches = patches.reshape(B, H * W, CK)
    probs = []
    for l in range(L):
        h = jnp.maximum(patches @ w1[l] + b1[l], 0.0)     # (B, HW, F)
        pooled = h.mean(axis=1)                           # (B, F)
        logits = pooled @ w2[l] + b2[l]                   # (B, NC)
        probs.append(jax.nn.softmax(logits, axis=-1))
    ind = jnp.stack(probs, axis=1)                        # (B, L, NC)
    return ind.mean(axis=1, keepdims=True), ind


if __name__ == "__main__":
    # small, deterministic setup
    B, C, H, W = 2, 4, 16, 16        # input image batch (NCHW)
    L = 3                            # num_learners
    F = 32                           # conv hidden channels
    NC = 10                          # num_classes

    key = jax.random.PRNGKey(0)
    kx, k1, kb1, k2, kb2 = jax.random.split(key, 5)
    x = jax.random.normal(kx, (B, C, H, W), dtype=jnp.float32)
    w1 = jax.random.normal(k1, (L, C * 9, F), dtype=jnp.float32) * 0.1
    b1 = jax.random.normal(kb1, (L, F), dtype=jnp.float32) * 0.1
    w2 = jax.random.normal(k2, (L, F, NC), dtype=jnp.float32) * 0.1
    b2 = jax.random.normal(kb2, (L, NC), dtype=jnp.float32) * 0.1

    ensemble_pred, ind_pred, convex_weights = jax.block_until_ready(
        jax.jit(ensemble_forward)(x, w1, b1, w2, b2))

    # sanity: shapes match PyTorch semantics; probs sum to 1; mean is correct
    assert ensemble_pred.shape == (B, 1, NC)
    assert ind_pred.shape == (B, L, NC)
    assert convex_weights.shape == (B, L, NC)
    assert jnp.allclose(ind_pred.sum(-1), 1.0, atol=1e-3)
    assert jnp.allclose(ensemble_pred[:, 0, :], ind_pred.mean(axis=1), atol=1e-6)

    # correctness vs pure-JAX f32 reference (bf16 matmuls -> loose tolerance)
    ref_ens, ref_ind = _reference_forward(x, w1, b1, w2, b2)
    assert jnp.allclose(ind_pred, ref_ind, atol=1e-2)
    assert jnp.allclose(ensemble_pred, ref_ens, atol=1e-2)

    print("KERNEL_OK")
</pallas_src>

<mosaic_0001>
module attributes {stable_mosaic.version = 11 : i64} {
  func.func @_ensemble_kernel(%arg0: i32, %arg1: memref<256x36xbf16, #tpu.memory_space<vmem>>, %arg2: memref<36x128xbf16, #tpu.memory_space<vmem>>, %arg3: memref<1x128xf32, #tpu.memory_space<vmem>>, %arg4: memref<128x384xbf16, #tpu.memory_space<vmem>>, %arg5: memref<1x384xf32, #tpu.memory_space<vmem>>, %arg6: memref<1x3x128xf32, #tpu.memory_space<vmem>>) attributes {dimension_semantics = [#tpu.dimension_semantics<parallel>], iteration_bounds = array<i64: 2>, scalar_prefetch = 0 : i64, scratch_operands = 0 : i64, tpu.core_type = #tpu.core_type<tc>, window_params = [{transform_indices = @transform_0, window_bounds = array<i64: 256, 36>}, {pipeline_mode = #tpu.pipeline_mode<synchronous>, transform_indices = @transform_1, window_bounds = array<i64: 36, 128>}, {pipeline_mode = #tpu.pipeline_mode<synchronous>, transform_indices = @transform_2, window_bounds = array<i64: 1, 128>}, {pipeline_mode = #tpu.pipeline_mode<synchronous>, transform_indices = @transform_3, window_bounds = array<i64: 128, 384>}, {pipeline_mode = #tpu.pipeline_mode<synchronous>, transform_indices = @transform_4, window_bounds = array<i64: 1, 384>}, {transform_indices = @transform_5, window_bounds = array<i64: 1, 3, 128>}]} {
    %c0 = arith.constant 0 : index
    %c0_0 = arith.constant 0 : index
    %0 = vector.load %arg1[%c0, %c0_0] : memref<256x36xbf16, #tpu.memory_space<vmem>>, vector<256x36xbf16>
    %c0_1 = arith.constant 0 : index
    %c0_2 = arith.constant 0 : index
    %1 = vector.load %arg2[%c0_1, %c0_2] : memref<36x128xbf16, #tpu.memory_space<vmem>>, vector<36x128xbf16>
    %cst = arith.constant dense<0.000000e+00> : vector<256x128xf32>
    %2 = tpu.matmul %0, %1, %cst {dimension_numbers = #tpu.dot_dimension_numbers<[1], [0], [0], [1], [0, 0, 1, 1], [], []>} : vector<256x36xbf16>, vector<36x128xbf16>, vector<256x128xf32> -> vector<256x128xf32>
    %c0_3 = arith.constant 0 : index
    %c0_4 = arith.constant 0 : index
    %3 = vector.load %arg3[%c0_3, %c0_4] : memref<1x128xf32, #tpu.memory_space<vmem>>, vector<1x128xf32>
    %4 = vector.broadcast %3 : vector<1x128xf32> to vector<256x128xf32>
    %5 = arith.addf %2, %4 : vector<256x128xf32>
    %cst_5 = arith.constant 0.000000e+00 : f32
    %6 = vector.broadcast %cst_5 : f32 to vector<256x128xf32>
    %7 = arith.maximumf %5, %6 : vector<256x128xf32>
    %8 = vector.shape_cast %7 : vector<256x128xf32> to vector<1x256x128xf32>
    %cst_6 = arith.constant dense<0.000000e+00> : vector<1x128xf32>
    %9 = vector.multi_reduction <add>, %8, %cst_6 [1] : vector<1x256x128xf32> to vector<1x128xf32>
    %cst_7 = arith.constant 3.906250e-03 : f32
    %10 = vector.broadcast %cst_7 : f32 to vector<1x128xf32>
    %11 = arith.mulf %9, %10 : vector<1x128xf32>
    %12 = arith.truncf %11 : vector<1x128xf32> to vector<1x128xbf16>
    %c0_8 = arith.constant 0 : index
    %c0_9 = arith.constant 0 : index
    %13 = vector.load %arg4[%c0_8, %c0_9] : memref<128x384xbf16, #tpu.memory_space<vmem>>, vector<128x384xbf16>
    %cst_10 = arith.constant dense<0.000000e+00> : vector<1x384xf32>
    %14 = tpu.matmul %12, %13, %cst_10 {dimension_numbers = #tpu.dot_dimension_numbers<[1], [0], [0], [1], [0, 0, 1, 1], [], []>} : vector<1x128xbf16>, vector<128x384xbf16>, vector<1x384xf32> -> vector<1x384xf32>
    %c0_11 = arith.constant 0 : index
    %c0_12 = arith.constant 0 : index
    %15 = vector.load %arg5[%c0_11, %c0_12] : memref<1x384xf32, #tpu.memory_space<vmem>>, vector<1x384xf32>
    %16 = arith.addf %14, %15 : vector<1x384xf32>
    %17 = vector.extract_strided_slice %16 {offsets = [0, 0], sizes = [1, 128], strides = [1, 1]} : vector<1x384xf32> to vector<1x128xf32>
    %cst_13 = arith.constant dense<0xFF800000> : vector<1xf32>
    %18 = vector.multi_reduction <maximumf>, %17, %cst_13 [1] : vector<1x128xf32> to vector<1xf32>
    %19 = vector.shape_cast %18 : vector<1xf32> to vector<1x1xf32>
    %20 = vector.broadcast %19 : vector<1x1xf32> to vector<1x128xf32>
    %21 = arith.subf %17, %20 : vector<1x128xf32>
    %22 = math.exp %21 : vector<1x128xf32>
    %cst_14 = arith.constant dense<0.000000e+00> : vector<1xf32>
    %23 = vector.multi_reduction <add>, %22, %cst_14 [1] : vector<1x128xf32> to vector<1xf32>
    %24 = vector.shape_cast %23 : vector<1xf32> to vector<1x1xf32>
    %25 = vector.broadcast %24 : vector<1x1xf32> to vector<1x128xf32>
    %26 = arith.divf %22, %25 : vector<1x128xf32>
    %c0_15 = arith.constant 0 : index
    %c0_16 = arith.constant 0 : index
    %c0_17 = arith.constant 0 : index
    %27 = vector.load %arg6[%c0_15, %c0_16, %c0_17] : memref<1x3x128xf32, #tpu.memory_space<vmem>>, vector<1x1x128xf32>
    %28 = vector.shape_cast %27 : vector<1x1x128xf32> to vector<1x128xf32>
    %29 = vector.shape_cast %26 : vector<1x128xf32> to vector<1x1x128xf32>
    tpu.vector_store %arg6[%c0_15, %c0_16, %c0_17], %29 {strides = array<i32>} : memref<1x3x128xf32, #tpu.memory_space<vmem>>, vector<1x1x128xf32>,
    %30 = vector.extract_strided_slice %16 {offsets = [0, 128], sizes = [1, 128], strides = [1, 1]} : vector<1x384xf32> to vector<1x128xf32>
    %cst_18 = arith.constant dense<0xFF800000> : vector<1xf32>
    %31 = vector.multi_reduction <maximumf>, %30, %cst_18 [1] : vector<1x128xf32> to vector<1xf32>
    %32 = vector.shape_cast %31 : vector<1xf32> to vector<1x1xf32>
    %33 = vector.broadcast %32 : vector<1x1xf32> to vector<1x128xf32>
    %34 = arith.subf %30, %33 : vector<1x128xf32>
    %35 = math.exp %34 : vector<1x128xf32>
    %cst_19 = arith.constant dense<0.000000e+00> : vector<1xf32>
    %36 = vector.multi_reduction <add>, %35, %cst_19 [1] : vector<1x128xf32> to vector<1xf32>
    %37 = vector.shape_cast %36 : vector<1xf32> to vector<1x1xf32>
    %38 = vector.broadcast %37 : vector<1x1xf32> to vector<1x128xf32>
    %39 = arith.divf %35, %38 : vector<1x128xf32>
    %c0_20 = arith.constant 0 : index
    %c1 = arith.constant 1 : index
    %c0_21 = arith.constant 0 : index
    %40 = vector.load %arg6[%c0_20, %c1, %c0_21] : memref<1x3x128xf32, #tpu.memory_space<vmem>>, vector<1x1x128xf32>
    %41 = vector.shape_cast %40 : vector<1x1x128xf32> to vector<1x128xf32>
    %42 = vector.shape_cast %39 : vector<1x128xf32> to vector<1x1x128xf32>
    tpu.vector_store %arg6[%c0_20, %c1, %c0_21], %42 {strides = array<i32>} : memref<1x3x128xf32, #tpu.memory_space<vmem>>, vector<1x1x128xf32>,
    %43 = vector.extract_strided_slice %16 {offsets = [0, 256], sizes = [1, 128], strides = [1, 1]} : vector<1x384xf32> to vector<1x128xf32>
    %cst_22 = arith.constant dense<0xFF800000> : vector<1xf32>
    %44 = vector.multi_reduction <maximumf>, %43, %cst_22 [1] : vector<1x128xf32> to vector<1xf32>
    %45 = vector.shape_cast %44 : vector<1xf32> to vector<1x1xf32>
    %46 = vector.broadcast %45 : vector<1x1xf32> to vector<1x128xf32>
    %47 = arith.subf %43, %46 : vector<1x128xf32>
    %48 = math.exp %47 : vector<1x128xf32>
    %cst_23 = arith.constant dense<0.000000e+00> : vector<1xf32>
    %49 = vector.multi_reduction <add>, %48, %cst_23 [1] : vector<1x128xf32> to vector<1xf32>
    %50 = vector.shape_cast %49 : vector<1xf32> to vector<1x1xf32>
    %51 = vector.broadcast %50 : vector<1x1xf32> to vector<1x128xf32>
    %52 = arith.divf %48, %51 : vector<1x128xf32>
    %c0_24 = arith.constant 0 : index
    %c2 = arith.constant 2 : index
    %c0_25 = arith.constant 0 : index
    %53 = vector.load %arg6[%c0_24, %c2, %c0_25] : memref<1x3x128xf32, #tpu.memory_space<vmem>>, vector<1x1x128xf32>
    %54 = vector.shape_cast %53 : vector<1x1x128xf32> to vector<1x128xf32>
    %55 = vector.shape_cast %52 : vector<1x128xf32> to vector<1x1x128xf32>
    tpu.vector_store %arg6[%c0_24, %c2, %c0_25], %55 {strides = array<i32>} : memref<1x3x128xf32, #tpu.memory_space<vmem>>, vector<1x1x128xf32>,
    return
  }
  func.func @transform_0(%arg0: i32) -> (i32, i32) {
    %c0_i32 = arith.constant 0 : i32
    %c0_i32_0 = arith.constant 0 : i32
    return %arg0, %c0_i32 : i32, i32
  }
  func.func @transform_1(%arg0: i32) -> (i32, i32) {
    %c0_i32 = arith.constant 0 : i32
    %c0_i32_0 = arith.constant 0 : i32
    %c0_i32_1 = arith.constant 0 : i32
    return %c0_i32, %c0_i32_0 : i32, i32
  }
  func.func @transform_2(%arg0: i32) -> (i32, i32) {
    %c0_i32 = arith.constant 0 : i32
    %c0_i32_0 = arith.constant 0 : i32
    %c0_i32_1 = arith.constant 0 : i32
    return %c0_i32, %c0_i32_0 : i32, i32
  }
  func.func @transform_3(%arg0: i32) -> (i32, i32) {
    %c0_i32 = arith.constant 0 : i32
    %c0_i32_0 = arith.constant 0 : i32
    %c0_i32_1 = arith.constant 0 : i32
    return %c0_i32, %c0_i32_0 : i32, i32
  }
  func.func @transform_4(%arg0: i32) -> (i32, i32) {
    %c0_i32 = arith.constant 0 : i32
    %c0_i32_0 = arith.constant 0 : i32
    %c0_i32_1 = arith.constant 0 : i32
    return %c0_i32, %c0_i32_0 : i32, i32
  }
  func.func @transform_5(%arg0: i32) -> (i32, i32, i32) {
    %c0_i32 = arith.constant 0 : i32
    %c0_i32_0 = arith.constant 0 : i32
    %c0_i32_1 = arith.constant 0 : i32
    return %arg0, %c0_i32, %c0_i32_0 : i32, i32, i32
  }
}

</mosaic_0001>

<llo_original>
// kernel: ensemble_forward.1
$region0: #{ensemble_forward.1}
  #allocation0 [shape = 'u32[]', space=smem, size = 0x4, offset = 0x4, fixed_abs, tag = 'smem constant byte address 0x4 - core index']
  #allocation1 [shape = 'u32[144,128]{1,0:T(1,128)}', space=vmem, size = 0x12000, scoped, tag = 'internal scratch']
  %s0 = inlined_call_operand.vmem [shape: bf16[512,36], index: 0, kind: input, shape index: {}]
  %s1 = inlined_call_operand.vmem [shape: bf16[36,128], index: 1, kind: input, shape index: {}]
  %s2 = inlined_call_operand.vmem [shape: f32[1,128], index: 2, kind: input, shape index: {}]
  %s3 = inlined_call_operand.vmem [shape: bf16[128,384], index: 3, kind: input, shape index: {}]
  %s4 = inlined_call_operand.vmem [shape: f32[1,384], index: 4, kind: input, shape index: {}]
  %s5 = inlined_call_operand.vmem [shape: f32[2,3,128], index: 5, kind: output, shape index: {}]
  %s6 = sld [smem:[#allocation0]]
  $region53: #{ensemble_forward.1} parent=0
    _
  %s8 = ssub.s32 1, %s6
  %s9 = scalar_select 0, %s8, %s6
  loop: start=0, step=1, limit=4
  $region2: #{ensemble_forward.1} parent=0 // loop_pre_header
    _
  $region3: #{ensemble_forward.1} parent=0 // loop_header
    %s11 = sphi 0, %s15
    %p12 = scmp.ge.s32.totalorder %s11, 4
    %s21 = sphi 0, %s23
    %s24 = sphi 0, %s21
    %s25 = sphi 0, %s24
    %s41 = sphi 0, %s25
    %s45 = sphi 0, %s45
    %s47 = sphi 0, %s45
    %s48 = sphi 0, %s47
    %s62 = sphi 0, %s48
    %s66 = sphi 0, %s66
    %s68 = sphi 0, %s66
    %s69 = sphi 0, %s68
    %s83 = sphi 0, %s69
    %s87 = sphi 0, %s87
    %s89 = sphi 0, %s87
    %s90 = sphi 0, %s89
    %s104 = sphi 0, %s90
    %s108 = sphi 0, %s108
    %s110 = sphi 0, %s108
    %s111 = sphi 0, %s110
    %s125 = sphi 0, %s111
    %s131 = sphi 0, %s133
    %s134 = sphi 0, %s131
    %s135 = sphi 0, %s134
    %s151 = sphi 0, %s135
  $region4: #{ensemble_forward.1} parent=0 // loop_header_branch
    %14 = sbr.rel (%p12) target = $region8
  $region5: #{ensemble_forward.1} parent=0 // loop_body
    %s16 = ssub.s32 %s11, 1
    %s17 = ssub.s32 %s11, 2
    %s18 = sadd.s32 %s11, 1
    %s19 = ssub.s32 %s11, %s18
    %p20 = scmp.eq.s32.totalorder %s19, 0
    %s22 = sadd.s32 %s21, 1
    %s23 = scalar_select %p20, %s21, %s22
    %p26 = pneg %p20
    %p27 = scmp.eq.s32.totalorder %s11, 1
    %p28 = por %p26, %p27
    %p29 = scmp.ne.s32.totalorder %s21, %s24
    %p30 = scmp.eq.s32.totalorder %s11, 0
    %p31 = por %p29, %p30
    %p32 = scmp.ne.s32.totalorder %s21, %s24
    %p33 = scmp.eq.s32.totalorder %s16, 1
    %p34 = por %p32, %p33
    %p35 = scmp.ne.s32.totalorder %s24, %s25
    %p36 = scmp.eq.s32.totalorder %s16, 0
    %p37 = por %p35, %p36
    %p38 = scmp.ne.s32.totalorder %s24, %s25
    %p39 = scmp.eq.s32.totalorder %s17, 1
    %p40 = por %p38, %p39
    %p42 = scmp.ne.s32.totalorder %s25, %s41
    %p43 = scmp.eq.s32.totalorder %s17, 0
    %p44 = por %p42, %p43
    %s46 = sadd.s32 %s45, 1
    %p49 = scmp.eq.s32.totalorder %s11, 1
    %p50 = scmp.ne.s32.totalorder %s45, %s47
    %p51 = scmp.eq.s32.totalorder %s11, 0
    %p52 = por %p50, %p51
    %p53 = scmp.ne.s32.totalorder %s45, %s47
    %p54 = scmp.eq.s32.totalorder %s16, 1
    %p55 = por %p53, %p54
    %p56 = scmp.ne.s32.totalorder %s47, %s48
    %p57 = scmp.eq.s32.totalorder %s16, 0
    %p58 = por %p56, %p57
    %p59 = scmp.ne.s32.totalorder %s47, %s48
    %p60 = scmp.eq.s32.totalorder %s17, 1
    %p61 = por %p59, %p60
    %p63 = scmp.ne.s32.totalorder %s48, %s62
    %p64 = scmp.eq.s32.totalorder %s17, 0
    %p65 = por %p63, %p64
    %s67 = sadd.s32 %s66, 1
    %p70 = scmp.eq.s32.totalorder %s11, 1
    %p71 = scmp.ne.s32.totalorder %s66, %s68
    %p72 = scmp.eq.s32.totalorder %s11, 0
    %p73 = por %p71, %p72
    %p74 = scmp.ne.s32.totalorder %s66, %s68
    %p75 = scmp.eq.s32.totalorder %s16, 1
    %p76 = por %p74, %p75
    %p77 = scmp.ne.s32.totalorder %s68, %s69
    %p78 = scmp.eq.s32.totalorder %s16, 0
    %p79 = por %p77, %p78
    %p80 = scmp.ne.s32.totalorder %s68, %s69
    %p81 = scmp.eq.s32.totalorder %s17, 1
    %p82 = por %p80, %p81
    %p84 = scmp.ne.s32.totalorder %s69, %s83
    %p85 = scmp.eq.s32.totalorder %s17, 0
    %p86 = por %p84, %p85
    %s88 = sadd.s32 %s87, 1
    %p91 = scmp.eq.s32.totalorder %s11, 1
    %p92 = scmp.ne.s32.totalorder %s87, %s89
    %p93 = scmp.eq.s32.totalorder %s11, 0
    %p94 = por %p92, %p93
    %p95 = scmp.ne.s32.totalorder %s87, %s89
    %p96 = scmp.eq.s32.totalorder %s16, 1
    %p97 = por %p95, %p96
    %p98 = scmp.ne.s32.totalorder %s89, %s90
    %p99 = scmp.eq.s32.totalorder %s16, 0
    %p100 = por %p98, %p99
    %p101 = scmp.ne.s32.totalorder %s89, %s90
    %p102 = scmp.eq.s32.totalorder %s17, 1
    %p103 = por %p101, %p102
    %p105 = scmp.ne.s32.totalorder %s90, %s104
    %p106 = scmp.eq.s32.totalorder %s17, 0
    %p107 = por %p105, %p106
    %s109 = sadd.s32 %s108, 1
    %p112 = scmp.eq.s32.totalorder %s11, 1
    %p113 = scmp.ne.s32.totalorder %s108, %s110
    %p114 = scmp.eq.s32.totalorder %s11, 0
    %p115 = por %p113, %p114
    %p116 = scmp.ne.s32.totalorder %s108, %s110
    %p117 = scmp.eq.s32.totalorder %s16, 1
    %p118 = por %p116, %p117
    %p119 = scmp.ne.s32.totalorder %s110, %s111
    %p120 = scmp.eq.s32.totalorder %s16, 0
    %p121 = por %p119, %p120
    %p122 = scmp.ne.s32.totalorder %s110, %s111
    %p123 = scmp.eq.s32.totalorder %s17, 1
    %p124 = por %p122, %p123
    %p126 = scmp.ne.s32.totalorder %s111, %s125
    %p127 = scmp.eq.s32.totalorder %s17, 0
    %p128 = por %p126, %p127
    %s129 = ssub.s32 %s11, %s18
    %p130 = scmp.eq.s32.totalorder %s129, 0
    %s132 = sadd.s32 %s131, 1
    %s133 = scalar_select %p130, %s131, %s132
    %p136 = pneg %p130
    %p137 = scmp.eq.s32.totalorder %s11, 1
    %p138 = por %p136, %p137
    %p139 = scmp.ne.s32.totalorder %s131, %s134
    %p140 = scmp.eq.s32.totalorder %s11, 0
    %p141 = por %p139, %p140
    %p142 = scmp.ne.s32.totalorder %s131, %s134
    %p143 = scmp.eq.s32.totalorder %s16, 1
    %p144 = por %p142, %p143
    %p145 = scmp.ne.s32.totalorder %s134, %s135
    %p146 = scmp.eq.s32.totalorder %s16, 0
    %p147 = por %p145, %p146
    %p148 = scmp.ne.s32.totalorder %s134, %s135
    %p149 = scmp.eq.s32.totalorder %s17, 1
    %p150 = por %p148, %p149
    %p152 = scmp.ne.s32.totalorder %s135, %s151
    %p153 = scmp.eq.s32.totalorder %s17, 0
    %p154 = por %p152, %p153
    %p155 = scmp.le.s32.totalorder 1, %s11
    %p156 = scmp.lt.s32.totalorder %s11, 3
    %p157 = pnand %p155, %p156
    %p158 = pneg %p157
    // Predicated region
    $region9: #{ensemble_forward.1} parent=5 // pred_check
      _
    $region10: #{ensemble_forward.1} parent=5 // pred_check_branch
      %160 = sbr.rel (%p157) target = $region12
    $region11: #{ensemble_forward.1} parent=5 // pred_region
      %s161 = ssub.s32 %s11, 1
      // Predicated region
      $region13: #{ensemble_forward.1} parent=11 // pred_check
        %p162 = pneg %p58
      $region14: #{ensemble_forward.1} parent=11 // pred_check_branch
        %164 = sbr.rel (%p162) target = $region16
      $region15: #{ensemble_forward.1} parent=11 // pred_region
        _
      $region16: #{ensemble_forward.1} parent=11 // pred_fallthru
        _
      // Predicated region
      $region17: #{ensemble_forward.1} parent=11 // pred_check
        %p165 = pneg %p79
      $region18: #{ensemble_forward.1} parent=11 // pred_check_branch
        %167 = sbr.rel (%p165) target = $region20
      $region19: #{ensemble_forward.1} parent=11 // pred_region
        _
      $region20: #{ensemble_forward.1} parent=11 // pred_fallthru
        _
      // Predicated region
      $region21: #{ensemble_forward.1} parent=11 // pred_check
        %p168 = pneg %p100
      $region22: #{ensemble_forward.1} parent=11 // pred_check_branch
        %170 = sbr.rel (%p168) target = $region24
      $region23: #{ensemble_forward.1} parent=11 // pred_region
        _
      $region24: #{ensemble_forward.1} parent=11 // pred_fallthru
        _
      // Predicated region
      $region25: #{ensemble_forward.1} parent=11 // pred_check
        %p171 = pneg %p121
      $region26: #{ensemble_forward.1} parent=11 // pred_check_branch
        %173 = sbr.rel (%p171) target = $region28
      $region27: #{ensemble_forward.1} parent=11 // pred_region
        _
      $region28: #{ensemble_forward.1} parent=11 // pred_fallthru
        _
    $region12: #{ensemble_forward.1} parent=5 // pred_fallthru
      _
    %p174 = scmp.lt.s32.totalorder %s11, 2
    // Predicated region
    $region29: #{ensemble_forward.1} parent=5 // pred_check
      %p175 = pneg %p174
    $region30: #{ensemble_forward.1} parent=5 // pred_check_branch
      %177 = sbr.rel (%p175) target = $region32
    $region31: #{ensemble_forward.1} parent=5 // pred_region
      // Predicated region
      $region33: #{ensemble_forward.1} parent=31 // pred_check
        %p178 = pneg %p31
      $region34: #{ensemble_forward.1} parent=31 // pred_check_branch
        %180 = sbr.rel (%p178) target = $region36
      $region35: #{ensemble_forward.1} parent=31 // pred_region
        %s181 = smul.u32 32, %s11
        %p182 = scmp.lt.s32.totalorder %s181, 63
        %s183 = scalar_select %p182, %s181, 63
        %s184 = smul.addr %s183, 4
        %s185 = scalar_lea.vmem %s0, %s184
        %s186 = smul.u32 32, %s11
      $region36: #{ensemble_forward.1} parent=31 // pred_fallthru
        _
    $region32: #{ensemble_forward.1} parent=5 // pred_fallthru
      _
    %p187 = scmp.le.s32.totalorder 1, %s11
    %p188 = scmp.lt.s32.totalorder %s11, 3
    %p189 = pnand %p187, %p188
    %p190 = pneg %p189
    // Predicated region
    $region37: #{ensemble_forward.1} parent=5 // pred_check
      _
    $region38: #{ensemble_forward.1} parent=5 // pred_check_branch
      %192 = sbr.rel (%p189) target = $region40
    $region39: #{ensemble_forward.1} parent=5 // pred_region
      %s193 = ssub.s32 %s11, 1
      %s194 = smul.u32 32, %s16
      %p195 = scmp.lt.s32.totalorder %s194, 63
      %s196 = scalar_select %p195, %s194, 63
      %s197 = smul.addr %s196, 4
      %s198 = scalar_lea.vmem %s0, %s197
      %p199 = pneg %p37
      %p200 = pneg %p34
      %p201 = pneg %p58
      %p202 = pneg %p55
      %p203 = pneg %p79
      %p204 = pneg %p76
      %p205 = pneg %p100
      %p206 = pneg %p97
      %p207 = pneg %p121
      %p208 = pneg %p118
      %p209 = pneg %p147
      %p210 = pneg %p144
      %p211 = scmp.lt.s32.totalorder %s16, 1
      %s212 = scalar_select %p211, %s16, 1
      %s213 = smul.addr %s212, 4
      %s214 = scalar_lea.vmem %s5, %s213
      %s215 = smul.u32 32, %s16
      %p216 = scmp.lt.s32.totalorder %s215, 63
      %s217 = scalar_select %p216, %s215, 63
      %s218 = smul.addr %s217, 4
      %s219 = scalar_lea.vmem %s0, %s218
      %s220 = smul.u32 32, %s16
      %p221 = scmp.lt.s32.totalorder %s16, 1
      %s222 = scalar_select %p221, %s16, 1
      %s223 = smul.addr %s222, 4
      %s224 = scalar_lea.vmem %s5, %s223
      %v226 = vld [vmem:[%s219] sm:$0xf]
      %v227 = vld [vmem:[%s219 + $0x4] sm:$0xf]
      %v228 = vld [vmem:[%s219 + $0x8] sm:$0xf]
      %v229 = vld [vmem:[%s219 + $0xc] sm:$0xf]
      %v230 = vld [vmem:[%s219 + $0x10] sm:$0xf]
      %v231 = vld [vmem:[%s219 + $0x14] sm:$0xf]
      %v232 = vld [vmem:[%s219 + $0x18] sm:$0xf]
      %v233 = vld [vmem:[%s219 + $0x1c] sm:$0xf]
      %v234 = vld [vmem:[%s219 + $0x20] sm:$0xf]
      %v235 = vld [vmem:[%s219 + $0x24] sm:$0xf]
      %v236 = vld [vmem:[%s219 + $0x28] sm:$0xf]
      %v237 = vld [vmem:[%s219 + $0x2c] sm:$0xf]
      %v238 = vld [vmem:[%s219 + $0x30] sm:$0xf]
      %v239 = vld [vmem:[%s219 + $0x34] sm:$0xf]
      %v240 = vld [vmem:[%s219 + $0x38] sm:$0xf]
      %v241 = vld [vmem:[%s219 + $0x3c] sm:$0xf]
      %v242 = vld [vmem:[%s219 + $0x40] sm:$0xf]
      %v243 = vld [vmem:[%s219 + $0x44] sm:$0xf]
      %v244 = vld [vmem:[%s219 + $0x48] sm:$0xf]
      %v245 = vld [vmem:[%s219 + $0x4c] sm:$0xf]
      %v246 = vld [vmem:[%s219 + $0x50] sm:$0xf]
      %v247 = vld [vmem:[%s219 + $0x54] sm:$0xf]
      %v248 = vld [vmem:[%s219 + $0x58] sm:$0xf]
      %v249 = vld [vmem:[%s219 + $0x5c] sm:$0xf]
      %v250 = vld [vmem:[%s219 + $0x60] sm:$0xf]
      %v251 = vld [vmem:[%s219 + $0x64] sm:$0xf]
      %v252 = vld [vmem:[%s219 + $0x68] sm:$0xf]
      %v253 = vld [vmem:[%s219 + $0x6c] sm:$0xf]
      %v254 = vld [vmem:[%s219 + $0x70] sm:$0xf]
      %v255 = vld [vmem:[%s219 + $0x74] sm:$0xf]
      %v256 = vld [vmem:[%s219 + $0x78] sm:$0xf]
      %v257 = vld [vmem:[%s219 + $0x7c] sm:$0xf]
      %v258 = vld [vmem:[%s1] sm:$0xf]
      %v259 = vld [vmem:[%s1 + $0x4] sm:$0xf]
      %v260 = vld [vmem:[%s1 + $0x8] sm:$0xf]
      %v261 = vld [vmem:[%s1 + $0xc] sm:$0xf]
      %v262 = vld [vmem:[%s1 + $0x10] sm:$0x3]
      %v263 = vld [vmem:[%s2] sm:$0x1]
      %v265 = vlaneseq
      %v266 = vshrl.u32 %v265, 7
      %v267 = vsub.s32 0, %v266
      %v268 = vrot.slane %v263, %v267
      %v302 = vunpack.c.l.b16 %v226
      %v303 = vunpack.c.l.b16 %v227
      %v304 = vunpack.c.l.b16 %v228
      %v305 = vunpack.c.l.b16 %v229
      %v306 = vunpack.c.l.b16 %v230
      %v307 = vunpack.c.l.b16 %v231
      %v308 = vunpack.c.l.b16 %v232
      %v309 = vunpack.c.l.b16 %v233
      %v310 = vunpack.c.l.b16 %v234
      %v311 = vunpack.c.l.b16 %v235
      %v312 = vunpack.c.l.b16 %v236
      %v313 = vunpack.c.l.b16 %v237
      %v314 = vunpack.c.l.b16 %v238
      %v315 = vunpack.c.l.b16 %v239
      %v316 = vunpack.c.l.b16 %v240
      %v317 = vunpack.c.l.b16 %v241
      %v318 = vunpack.c.l.b16 %v242
      %v319 = vunpack.c.l.b16 %v243
      %v320 = vunpack.c.l.b16 %v244
      %v321 = vunpack.c.l.b16 %v245
      %v322 = vunpack.c.l.b16 %v246
      %v323 = vunpack.c.l.b16 %v247
      %v324 = vunpack.c.l.b16 %v248
      %v325 = vunpack.c.l.b16 %v249
      %v326 = vunpack.c.l.b16 %v250
      %v327 = vunpack.c.l.b16 %v251
      %v328 = vunpack.c.l.b16 %v252
      %v329 = vunpack.c.l.b16 %v253
      %v330 = vunpack.c.l.b16 %v254
      %v331 = vunpack.c.l.b16 %v255
      %v332 = vunpack.c.l.b16 %v256
      %v333 = vunpack.c.l.b16 %v257
      %v334 = vpack.c.b16 %v303, %v302
      %v335 = vpack.c.b16 %v305, %v304
      %v336 = vpack.c.b16 %v307, %v306
      %v337 = vpack.c.b16 %v309, %v308
      %v338 = vpack.c.b16 %v311, %v310
      %v339 = vpack.c.b16 %v313, %v312
      %v340 = vpack.c.b16 %v315, %v314
      %v341 = vpack.c.b16 %v317, %v316
      %v342 = vpack.c.b16 %v319, %v318
      %v343 = vpack.c.b16 %v321, %v320
      %v344 = vpack.c.b16 %v323, %v322
      %v345 = vpack.c.b16 %v325, %v324
      %v346 = vpack.c.b16 %v327, %v326
      %v347 = vpack.c.b16 %v329, %v328
      %v348 = vpack.c.b16 %v331, %v330
      %v349 = vpack.c.b16 %v333, %v332
      %v355 = vunpack.c.l.b16 %v258
      %v356 = vunpack.c.l.b16 %v259
      %v357 = vunpack.c.l.b16 %v260
      %v358 = vunpack.c.l.b16 %v261
      %v359 = vunpack.c.l.b16 %v262
      %v360 = vpack.c.b16 %v356, %v355
      %v361 = vpack.c.b16 %v358, %v357
      %v362 = vpack.c.b16 %v359, %v359
      %vm365 = vcmask 293888
      %v367 = vsel %vm365, %v334, 0
      %v370 = vsel %vm365, %v335, 0
      %v373 = vsel %vm365, %v336, 0
      %v376 = vsel %vm365, %v337, 0
      %v379 = vsel %vm365, %v338, 0
      %v382 = vsel %vm365, %v339, 0
      %v385 = vsel %vm365, %v340, 0
      %v388 = vsel %vm365, %v341, 0
      %v391 = vsel %vm365, %v342, 0
      %v394 = vsel %vm365, %v343, 0
      %v397 = vsel %vm365, %v344, 0
      %v400 = vsel %vm365, %v345, 0
      %v403 = vsel %vm365, %v346, 0
      %v406 = vsel %vm365, %v347, 0
      %v409 = vsel %vm365, %v348, 0
      %v412 = vsel %vm365, %v349, 0
      %vm414 = vcmask 1041408
      %v416 = vsel %vm414, %v362, 0
      %418 = vmatprep.subr.bf16.mxu0 0
      %419 = vmatpush1.bf16.msra.mxu0 %v360
      %420 = vmatprep.subr.bf16.mxu0 0
      %421 = vmatpush1.bf16.msra.mxu0 %v361
      %422 = vmatprep.subr.bf16.mxu0 0
      %423 = vmatpush1.bf16.msra.mxu0 %v416
      %424 = vmatprep.subr.bf16.mxu0 0
      %425 = vmatpush1.bf16.msra.mxu0 0
      %426 = vmatprep.subr.bf16.mxu0 0
      %427 = vmatpush1.bf16.msra.mxu0 0
      %428 = vmatprep.subr.bf16.mxu0 0
      %429 = vmatpush1.bf16.msra.mxu0 0
      %430 = vmatprep.subr.bf16.mxu0 0
      %431 = vmatpush1.bf16.msra.mxu0 0
      %432 = vmatprep.subr.bf16.mxu0 0
      %433 = vmatpush1.bf16.msra.mxu0 0
      %434 = vmatprep.subr.bf16.mxu0 0
      %435 = vmatpush1.bf16.msra.mxu0 0
      %436 = vmatprep.subr.bf16.mxu0 0
      %437 = vmatpush1.bf16.msra.mxu0 0
      %438 = vmatprep.subr.bf16.mxu0 0
      %439 = vmatpush1.bf16.msra.mxu0 0
      %440 = vmatprep.subr.bf16.mxu0 0
      %441 = vmatpush1.bf16.msra.mxu0 0
      %442 = vmatprep.subr.bf16.mxu0 0
      %443 = vmatpush1.bf16.msra.mxu0 0
      %444 = vmatprep.subr.bf16.mxu0 0
      %445 = vmatpush1.bf16.msra.mxu0 0
      %446 = vmatprep.subr.bf16.mxu0 0
      %447 = vmatpush1.bf16.msra.mxu0 0
      %448 = vmatprep.subr.bf16.mxu0 0
      %449 = vmatpush1.bf16.msra.mxu0 0
      %450 = vmatprep.mubr.bf16.mxu0 0
      %451 = vmatmul.mubr.bf16.gmra.mrb[0].mxu0 %v367
      %v452 = vpop.f32.mrb[0].mxu0
      %v453 = vadd.f32 %v268, %v452
      %v454 = vpop.f32.mrb[0].mxu0
      %v455 = vpop.f32.mrb[0].mxu0
      %v456 = vadd.f32 %v268, %v455
      %v457 = vpop.f32.mrb[0].mxu0
      %458 = vmatprep.mubr.bf16.mxu0 0
      %459 = vmatmul.mubr.bf16.gmra.mrb[0].mxu0 %v370
      %v460 = vpop.f32.mrb[0].mxu0
      %v461 = vadd.f32 %v268, %v460
      %v462 = vpop.f32.mrb[0].mxu0
      %v463 = vpop.f32.mrb[0].mxu0
      %v464 = vadd.f32 %v268, %v463
      %v465 = vpop.f32.mrb[0].mxu0
      %466 = vmatprep.mubr.bf16.mxu0 0
      %467 = vmatmul.mubr.bf16.gmra.mrb[0].mxu0 %v373
      %v468 = vpop.f32.mrb[0].mxu0
      %v469 = vadd.f32 %v268, %v468
      %v470 = vpop.f32.mrb[0].mxu0
      %v471 = vpop.f32.mrb[0].mxu0
      %v472 = vadd.f32 %v268, %v471
      %v473 = vpop.f32.mrb[0].mxu0
      %474 = vmatprep.mubr.bf16.mxu0 0
      %475 = vmatmul.mubr.bf16.gmra.mrb[0].mxu0 %v376
      %v476 = vpop.f32.mrb[0].mxu0
      %v477 = vadd.f32 %v268, %v476
      %v478 = vpop.f32.mrb[0].mxu0
      %v479 = vpop.f32.mrb[0].mxu0
      %v480 = vadd.f32 %v268, %v479
      %v481 = vpop.f32.mrb[0].mxu0
      %482 = vmatprep.mubr.bf16.mxu0 0
      %483 = vmatmul.mubr.bf16.gmra.mrb[0].mxu0 %v379
      %v484 = vpop.f32.mrb[0].mxu0
      %v485 = vadd.f32 %v268, %v484
      %v486 = vpop.f32.mrb[0].mxu0
      %v487 = vpop.f32.mrb[0].mxu0
      %v488 = vadd.f32 %v268, %v487
      %v489 = vpop.f32.mrb[0].mxu0
      %490 = vmatprep.mubr.bf16.mxu0 0
      %491 = vmatmul.mubr.bf16.gmra.mrb[0].mxu0 %v382
      %v492 = vpop.f32.mrb[0].mxu0
      %v493 = vadd.f32 %v268, %v492
      %v494 = vpop.f32.mrb[0].mxu0
      %v495 = vpop.f32.mrb[0].mxu0
      %v496 = vadd.f32 %v268, %v495
      %v497 = vpop.f32.mrb[0].mxu0
      %498 = vmatprep.mubr.bf16.mxu0 0
      %499 = vmatmul.mubr.bf16.gmra.mrb[0].mxu0 %v385
      %v500 = vpop.f32.mrb[0].mxu0
      %v501 = vadd.f32 %v268, %v500
      %v502 = vpop.f32.mrb[0].mxu0
      %v503 = vpop.f32.mrb[0].mxu0
      %v504 = vadd.f32 %v268, %v503
      %v505 = vpop.f32.mrb[0].mxu0
      %506 = vmatprep.mubr.bf16.mxu0 0
      %507 = vmatmul.mubr.bf16.gmra.mrb[0].mxu0 %v388
      %v508 = vpop.f32.mrb[0].mxu0
      %v509 = vadd.f32 %v268, %v508
      %v510 = vpop.f32.mrb[0].mxu0
      %v511 = vpop.f32.mrb[0].mxu0
      %v512 = vadd.f32 %v268, %v511
      %v513 = vpop.f32.mrb[0].mxu0
      %514 = vmatprep.mubr.bf16.mxu0 0
      %515 = vmatmul.mubr.bf16.gmra.mrb[0].mxu0 %v391
      %v516 = vpop.f32.mrb[0].mxu0
      %v517 = vadd.f32 %v268, %v516
      %v518 = vpop.f32.mrb[0].mxu0
      %v519 = vpop.f32.mrb[0].mxu0
      %v520 = vadd.f32 %v268, %v519
      %v521 = vpop.f32.mrb[0].mxu0
      %522 = vmatprep.mubr.bf16.mxu0 0
      %523 = vmatmul.mubr.bf16.gmra.mrb[0].mxu0 %v394
      %v524 = vpop.f32.mrb[0].mxu0
      %v525 = vadd.f32 %v268, %v524
      %v526 = vpop.f32.mrb[0].mxu0
      %v527 = vpop.f32.mrb[0].mxu0
      %v528 = vadd.f32 %v268, %v527
      %v529 = vpop.f32.mrb[0].mxu0
      %530 = vmatprep.mubr.bf16.mxu0 0
      %531 = vmatmul.mubr.bf16.gmra.mrb[0].mxu0 %v397
      %v532 = vpop.f32.mrb[0].mxu0
      %v533 = vadd.f32 %v268, %v532
      %v534 = vpop.f32.mrb[0].mxu0
      %v535 = vpop.f32.mrb[0].mxu0
      %v536 = vadd.f32 %v268, %v535
      %v537 = vpop.f32.mrb[0].mxu0
      %538 = vmatprep.mubr.bf16.mxu0 0
      %539 = vmatmul.mubr.bf16.gmra.mrb[0].mxu0 %v400
      %v540 = vpop.f32.mrb[0].mxu0
      %v541 = vadd.f32 %v268, %v540
      %v542 = vpop.f32.mrb[0].mxu0
      %v543 = vpop.f32.mrb[0].mxu0
      %v544 = vadd.f32 %v268, %v543
      %v545 = vpop.f32.mrb[0].mxu0
      %546 = vmatprep.mubr.bf16.mxu0 0
      %547 = vmatmul.mubr.bf16.gmra.mrb[0].mxu0 %v403
      %v548 = vpop.f32.mrb[0].mxu0
      %v549 = vadd.f32 %v268, %v548
      %v550 = vpop.f32.mrb[0].mxu0
      %v551 = vpop.f32.mrb[0].mxu0
      %v552 = vadd.f32 %v268, %v551
      %v553 = vpop.f32.mrb[0].mxu0
      %554 = vmatprep.mubr.bf16.mxu0 0
      %555 = vmatmul.mubr.bf16.gmra.mrb[0].mxu0 %v406
      %v556 = vpop.f32.mrb[0].mxu0
      %v557 = vadd.f32 %v268, %v556
      %v558 = vpop.f32.mrb[0].mxu0
      %v559 = vpop.f32.mrb[0].mxu0
      %v560 = vadd.f32 %v268, %v559
      %v561 = vpop.f32.mrb[0].mxu0
      %562 = vmatprep.mubr.bf16.mxu0 0
      %563 = vmatmul.mubr.bf16.gmra.mrb[0].mxu0 %v409
      %v564 = vpop.f32.mrb[0].mxu0
      %v565 = vadd.f32 %v268, %v564
      %v566 = vpop.f32.mrb[0].mxu0
      %v567 = vpop.f32.mrb[0].mxu0
      %v568 = vadd.f32 %v268, %v567
      %v569 = vpop.f32.mrb[0].mxu0
      %570 = vmatprep.mubr.bf16.mxu0 0
      %571 = vmatmul.mubr.bf16.gmra.mrb[0].mxu0 %v412
      %v572 = vpop.f32.mrb[0].mxu0
      %v573 = vadd.f32 %v268, %v572
      %v574 = vpop.f32.mrb[0].mxu0
      %v575 = vpop.f32.mrb[0].mxu0
      %v576 = vadd.f32 %v268, %v575
      %v577 = vpop.f32.mrb[0].mxu0
      %578 = vdwg.mxu0
      %v579 = vmax.f32 %v453, 0.0
      %v580 = vmax.f32 %v456, 0.0
      %v581 = vmax.f32 %v461, 0.0
      %v582 = vmax.f32 %v464, 0.0
      %v583 = vmax.f32 %v469, 0.0
      %v584 = vmax.f32 %v472, 0.0
      %v585 = vmax.f32 %v477, 0.0
      %v586 = vmax.f32 %v480, 0.0
      %v587 = vmax.f32 %v485, 0.0
      %v588 = vmax.f32 %v488, 0.0
      %v589 = vmax.f32 %v493, 0.0
      %v590 = vmax.f32 %v496, 0.0
      %v591 = vmax.f32 %v501, 0.0
      %v592 = vmax.f32 %v504, 0.0
      %v593 = vmax.f32 %v509, 0.0
      %v594 = vmax.f32 %v512, 0.0
      %v595 = vmax.f32 %v517, 0.0
      %v596 = vmax.f32 %v520, 0.0
      %v597 = vmax.f32 %v525, 0.0
      %v598 = vmax.f32 %v528, 0.0
      %v599 = vmax.f32 %v533, 0.0
      %v600 = vmax.f32 %v536, 0.0
      %v601 = vmax.f32 %v541, 0.0
      %v602 = vmax.f32 %v544, 0.0
      %v603 = vmax.f32 %v549, 0.0
      %v604 = vmax.f32 %v552, 0.0
      %v605 = vmax.f32 %v557, 0.0
      %v606 = vmax.f32 %v560, 0.0
      %v607 = vmax.f32 %v565, 0.0
      %v608 = vmax.f32 %v568, 0.0
      %v609 = vmax.f32 %v573, 0.0
      %v610 = vmax.f32 %v576, 0.0
      %v611 = vadd.f32 %v579, %v580
      %v612 = vadd.f32 %v611, %v581
      %v613 = vadd.f32 %v612, %v582
      %v614 = vadd.f32 %v613, %v583
      %v615 = vadd.f32 %v614, %v584
      %v616 = vadd.f32 %v615, %v585
      %v617 = vadd.f32 %v616, %v586
      %v618 = vadd.f32 %v617, %v587
      %v619 = vadd.f32 %v618, %v588
      %v620 = vadd.f32 %v619, %v589
      %v621 = vadd.f32 %v620, %v590
      %v622 = vadd.f32 %v621, %v591
      %v623 = vadd.f32 %v622, %v592
      %v624 = vadd.f32 %v623, %v593
      %v625 = vadd.f32 %v624, %v594
      %v626 = vadd.f32 %v625, %v595
      %v627 = vadd.f32 %v626, %v596
      %v628 = vadd.f32 %v627, %v597
      %v629 = vadd.f32 %v628, %v598
      %v630 = vadd.f32 %v629, %v599
      %v631 = vadd.f32 %v630, %v600
      %v632 = vadd.f32 %v631, %v601
      %v633 = vadd.f32 %v632, %v602
      %v634 = vadd.f32 %v633, %v603
      %v635 = vadd.f32 %v634, %v604
      %v636 = vadd.f32 %v635, %v605
      %v637 = vadd.f32 %v636, %v606
      %v638 = vadd.f32 %v637, %v607
      %v639 = vadd.f32 %v638, %v608
      %v640 = vadd.f32 %v639, %v609
      %v641 = vadd.f32 %v640, %v610
      %v642 = vrot.slane %v641, 4
      %v643 = vadd.f32 %v641, %v642
      %v644 = vrot.slane %v643, 2
      %v645 = vadd.f32 %v643, %v644
      %v646 = vrot.slane %v645, 1
      %v647 = vadd.f32 %v645, %v646
      %v648 = vmul.f32 %v647, 0.00390625
      %v649 = vpack.c.bf16 %v648, %v648
      %v650 = vld [vmem:[%s3] sm:$0xff]
      %v651 = vld [vmem:[%s3 + $0x8] sm:$0xf]
      %v652 = vld [vmem:[%s3 + $0xc] sm:$0xff]
      %v653 = vld [vmem:[%s3 + $0x14] sm:$0xf]
      %v654 = vld [vmem:[%s3 + $0x18] sm:$0xff]
      %v655 = vld [vmem:[%s3 + $0x20] sm:$0xf]
      %v656 = vld [vmem:[%s3 + $0x24] sm:$0xff]
      %v657 = vld [vmem:[%s3 + $0x2c] sm:$0xf]
      %v658 = vld [vmem:[%s3 + $0x30] sm:$0xff]
      %v659 = vld [vmem:[%s3 + $0x38] sm:$0xf]
      %v660 = vld [vmem:[%s3 + $0x3c] sm:$0xff]
      %v661 = vld [vmem:[%s3 + $0x44] sm:$0xf]
      %v662 = vld [vmem:[%s3 + $0x48] sm:$0xff]
      %v663 = vld [vmem:[%s3 + $0x50] sm:$0xf]
      %v664 = vld [vmem:[%s3 + $0x54] sm:$0xff]
      %v665 = vld [vmem:[%s3 + $0x5c] sm:$0xf]
      %v666 = vld [vmem:[%s3 + $0x60] sm:$0xff]
      %v667 = vld [vmem:[%s3 + $0x68] sm:$0xf]
      %v668 = vld [vmem:[%s3 + $0x6c] sm:$0xff]
      %v669 = vld [vmem:[%s3 + $0x74] sm:$0xf]
      %v670 = vld [vmem:[%s3 + $0x78] sm:$0xff]
      %v671 = vld [vmem:[%s3 + $0x80] sm:$0xf]
      %v672 = vld [vmem:[%s3 + $0x84] sm:$0xff]
      %v673 = vld [vmem:[%s3 + $0x8c] sm:$0xf]
      %v674 = vld [vmem:[%s3 + $0x90] sm:$0xff]
      %v675 = vld [vmem:[%s3 + $0x98] sm:$0xf]
      %v676 = vld [vmem:[%s3 + $0x9c] sm:$0xff]
      %v677 = vld [vmem:[%s3 + $0xa4] sm:$0xf]
      %v678 = vld [vmem:[%s3 + $0xa8] sm:$0xff]
      %v679 = vld [vmem:[%s3 + $0xb0] sm:$0xf]
      %v680 = vld [vmem:[%s3 + $0xb4] sm:$0xff]
      %v681 = vld [vmem:[%s3 + $0xbc] sm:$0xf]
      %v682 = vld [vmem:[%s4] sm:$0x7]
      %v715 = vunpack.c.l.b16 %v650
      %v716 = vunpack.c.h.b16 %v650
      %v717 = vunpack.c.l.b16 %v651
      %v718 = vunpack.c.l.b16 %v652
      %v719 = vunpack.c.h.b16 %v652
      %v720 = vunpack.c.l.b16 %v653
      %v721 = vunpack.c.l.b16 %v654
      %v722 = vunpack.c.h.b16 %v654
      %v723 = vunpack.c.l.b16 %v655
      %v724 = vunpack.c.l.b16 %v656
      %v725 = vunpack.c.h.b16 %v656
      %v726 = vunpack.c.l.b16 %v657
      %v727 = vunpack.c.l.b16 %v658
      %v728 = vunpack.c.h.b16 %v658
      %v729 = vunpack.c.l.b16 %v659
      %v730 = vunpack.c.l.b16 %v660
      %v731 = vunpack.c.h.b16 %v660
      %v732 = vunpack.c.l.b16 %v661
      %v733 = vunpack.c.l.b16 %v662
      %v734 = vunpack.c.h.b16 %v662
      %v735 = vunpack.c.l.b16 %v663
      %v736 = vunpack.c.l.b16 %v664
      %v737 = vunpack.c.h.b16 %v664
      %v738 = vunpack.c.l.b16 %v665
      %v739 = vunpack.c.l.b16 %v666
      %v740 = vunpack.c.h.b16 %v666
      %v741 = vunpack.c.l.b16 %v667
      %v742 = vunpack.c.l.b16 %v668
      %v743 = vunpack.c.h.b16 %v668
      %v744 = vunpack.c.l.b16 %v669
      %v745 = vunpack.c.l.b16 %v670
      %v746 = vunpack.c.h.b16 %v670
      %v747 = vunpack.c.l.b16 %v671
      %v748 = vunpack.c.l.b16 %v672
      %v749 = vunpack.c.h.b16 %v672
      %v750 = vunpack.c.l.b16 %v673
      %v751 = vunpack.c.l.b16 %v674
      %v752 = vunpack.c.h.b16 %v674
      %v753 = vunpack.c.l.b16 %v675
      %v754 = vunpack.c.l.b16 %v676
      %v755 = vunpack.c.h.b16 %v676
      %v756 = vunpack.c.l.b16 %v677
      %v757 = vunpack.c.l.b16 %v678
      %v758 = vunpack.c.h.b16 %v678
      %v759 = vunpack.c.l.b16 %v679
      %v760 = vunpack.c.l.b16 %v680
      %v761 = vunpack.c.h.b16 %v680
      %v762 = vunpack.c.l.b16 %v681
      %v763 = vpack.c.b16 %v718, %v715
      %v764 = vpack.c.b16 %v719, %v716
      %v765 = vpack.c.b16 %v720, %v717
      %v766 = vpack.c.b16 %v724, %v721
      %v767 = vpack.c.b16 %v725, %v722
      %v768 = vpack.c.b16 %v726, %v723
      %v769 = vpack.c.b16 %v730, %v727
      %v770 = vpack.c.b16 %v731, %v728
      %v771 = vpack.c.b16 %v732, %v729
      %v772 = vpack.c.b16 %v736, %v733
      %v773 = vpack.c.b16 %v737, %v734
      %v774 = vpack.c.b16 %v738, %v735
      %v775 = vpack.c.b16 %v742, %v739
      %v776 = vpack.c.b16 %v743, %v740
      %v777 = vpack.c.b16 %v744, %v741
      %v778 = vpack.c.b16 %v748, %v745
      %v779 = vpack.c.b16 %v749, %v746
      %v780 = vpack.c.b16 %v750, %v747
      %v781 = vpack.c.b16 %v754, %v751
      %v782 = vpack.c.b16 %v755, %v752
      %v783 = vpack.c.b16 %v756, %v753
      %v784 = vpack.c.b16 %v760, %v757
      %v785 = vpack.c.b16 %v761, %v758
      %v786 = vpack.c.b16 %v762, %v759
      %v812 = vlaneseq
      %v813 = vshrl.u32 %v812, 7
      %v814 = vsub.s32 0, %v813
      %v815 = vrot.slane %v682, %v814
      %v816 = vlaneseq
      %v817 = vshrl.u32 %v816, 7
      %v818 = vsub.s32 1, %v817
      %v819 = vrot.slane %v682, %v818
      %v820 = vlaneseq
      %v821 = vshrl.u32 %v820, 7
      %v822 = vsub.s32 2, %v821
      %v823 = vrot.slane %v682, %v822
      %827 = vmatprep.subr.bf16.mxu0 %v764
      %828 = vmatpush1.bf16.msra.mxu0 %v763
      %829 = vmatprep.subr.bf16.mxu0 %v767
      %830 = vmatpush1.bf16.msra.mxu0 %v766
      %831 = vmatprep.subr.bf16.mxu0 %v770
      %832 = vmatpush1.bf16.msra.mxu0 %v769
      %833 = vmatprep.subr.bf16.mxu0 %v773
      %834 = vmatpush1.bf16.msra.mxu0 %v772
      %835 = vmatprep.subr.bf16.mxu0 %v776
      %836 = vmatpush1.bf16.msra.mxu0 %v775
      %837 = vmatprep.subr.bf16.mxu0 %v779
      %838 = vmatpush1.bf16.msra.mxu0 %v778
      %839 = vmatprep.subr.bf16.mxu0 %v782
      %840 = vmatpush1.bf16.msra.mxu0 %v781
      %841 = vmatprep.subr.bf16.mxu0 %v785
      %842 = vmatpush1.bf16.msra.mxu0 %v784
      %843 = vmatprep.subr.bf16.mxu0 0
      %844 = vmatpush1.bf16.msra.mxu0 0
      %845 = vmatprep.subr.bf16.mxu0 0
      %846 = vmatpush1.bf16.msra.mxu0 0
      %847 = vmatprep.subr.bf16.mxu0 0
      %848 = vmatpush1.bf16.msra.mxu0 0
      %849 = vmatprep.subr.bf16.mxu0 0
      %850 = vmatpush1.bf16.msra.mxu0 0
      %851 = vmatprep.subr.bf16.mxu0 0
      %852 = vmatpush1.bf16.msra.mxu0 0
      %853 = vmatprep.subr.bf16.mxu0 0
      %854 = vmatpush1.bf16.msra.mxu0 0
      %855 = vmatprep.subr.bf16.mxu0 0
      %856 = vmatpush1.bf16.msra.mxu0 0
      %857 = vmatprep.subr.bf16.mxu0 0
      %858 = vmatpush1.bf16.msra.mxu0 0
      %859 = vmatprep.mubr.bf16.mxu0 0
      %860 = vmatmul.mubr.bf16.gmra.mrb[0].mxu0 %v649
      %v861 = vpop.f32.mrb[0].mxu0
      %v862 = vadd.f32 %v815, %v861
      %v863 = vpop.f32.mrb[0].mxu0
      %v864 = vadd.f32 %v819, %v863
      %v865 = vpop.f32.mrb[0].mxu0
      %v866 = vpop.f32.mrb[0].mxu0
      %867 = vdwg.mxu0
      %868 = vmatprep.subr.bf16.mxu0 0
      %869 = vmatpush1.bf16.msra.mxu0 %v765
      %870 = vmatprep.subr.bf16.mxu0 0
      %871 = vmatpush1.bf16.msra.mxu0 %v768
      %872 = vmatprep.subr.bf16.mxu0 0
      %873 = vmatpush1.bf16.msra.mxu0 %v771
      %874 = vmatprep.subr.bf16.mxu0 0
      %875 = vmatpush1.bf16.msra.mxu0 %v774
      %876 = vmatprep.subr.bf16.mxu0 0
      %877 = vmatpush1.bf16.msra.mxu0 %v777
      %878 = vmatprep.subr.bf16.mxu0 0
      %879 = vmatpush1.bf16.msra.mxu0 %v780
      %880 = vmatprep.subr.bf16.mxu0 0
      %881 = vmatpush1.bf16.msra.mxu0 %v783
      %882 = vmatprep.subr.bf16.mxu0 0
      %883 = vmatpush1.bf16.msra.mxu0 %v786
      %884 = vmatprep.subr.bf16.mxu0 0
      %885 = vmatpush1.bf16.msra.mxu0 0
      %886 = vmatprep.subr.bf16.mxu0 0
      %887 = vmatpush1.bf16.msra.mxu0 0
      %888 = vmatprep.subr.bf16.mxu0 0
      %889 = vmatpush1.bf16.msra.mxu0 0
      %890 = vmatprep.subr.bf16.mxu0 0
      %891 = vmatpush1.bf16.msra.mxu0 0
      %892 = vmatprep.subr.bf16.mxu0 0
      %893 = vmatpush1.bf16.msra.mxu0 0
      %894 = vmatprep.subr.bf16.mxu0 0
      %895 = vmatpush1.bf16.msra.mxu0 0
      %896 = vmatprep.subr.bf16.mxu0 0
      %897 = vmatpush1.bf16.msra.mxu0 0
      %898 = vmatprep.subr.bf16.mxu0 0
      %899 = vmatpush1.bf16.msra.mxu0 0
      %900 = vmatprep.mubr.bf16.mxu0 0
      %901 = vmatmul.mubr.bf16.gmra.mrb[0].mxu0 %v649
      %v902 = vpop.f32.mrb[0].mxu0
      %v903 = vadd.f32 %v823, %v902
      %v904 = vpop.f32.mrb[0].mxu0
      %v905 = vpop.f32.mrb[0].mxu0
      %v906 = vpop.f32.mrb[0].mxu0
      %907 = vdwg.mxu0
      %vm908 = vcmask 1040384
      %v909 = vsel %vm908, %v862, -inf
      %910 = vmax.xlane.f32.xlu0 %v909
      %v911 = vpop.xlane.xlu0 %910
      %v912 = vsub.f32 %v862, %v911
      %v913 = vmul.f32 %v912, 1.442695
      %v914 = vpow.pop %v913
      %v915 = vsel %vm908, %v914, 0.0
      %916 = vadd.xlane.f32.xlu0 %v915
      %v917 = vpop.xlane.xlu0 %916
      %v918 = vrcp.pop %v917
      %v919 = vmul.f32 %v914, %v918
      %920 = vst [vmem:[%s224] sm:$0x1] %v919
      %v921 = vsel %vm908, %v864, -inf
      %922 = vmax.xlane.f32.xlu0 %v921
      %v923 = vpop.xlane.xlu0 %922
      %v924 = vsub.f32 %v864, %v923
      %v925 = vmul.f32 %v924, 1.442695
      %v926 = vpow.pop %v925
      %v927 = vsel %vm908, %v926, 0.0
      %928 = vadd.xlane.f32.xlu0 %v927
      %v929 = vpop.xlane.xlu0 %928
      %v930 = vrcp.pop %v929
      %v931 = vmul.f32 %v926, %v930
      %932 = vst [vmem:[%s224 + $0x1] sm:$0x1] %v931
      %v933 = vsel %vm908, %v903, -inf
      %934 = vmax.xlane.f32.xlu0 %v933
      %v935 = vpop.xlane.xlu0 %934
      %v936 = vsub.f32 %v903, %v935
      %v937 = vmul.f32 %v936, 1.442695
      %v938 = vpow.pop %v937
      %v939 = vsel %vm908, %v938, 0.0
      %940 = vadd.xlane.f32.xlu0 %v939
      %v941 = vpop.xlane.xlu0 %940
      %v942 = vrcp.pop %v941
      %v943 = vmul.f32 %v938, %v942
      %944 = vst [vmem:[%s224 + $0x2] sm:$0x1] %v943
      %p945 = scmp.lt.s32.totalorder %s16, 1
      %s946 = scalar_select %p945, %s16, 1
      %s947 = smul.addr %s946, 4
      %s948 = scalar_lea.vmem %s5, %s947
      // Predicated region
      $region41: #{ensemble_forward.1} parent=39 // pred_check
        %p949 = pneg %p144
      $region42: #{ensemble_forward.1} parent=39 // pred_check_branch
        %951 = sbr.rel (%p949) target = $region44
      $region43: #{ensemble_forward.1} parent=39 // pred_region
        _
      $region44: #{ensemble_forward.1} parent=39 // pred_fallthru
        _
    $region40: #{ensemble_forward.1} parent=5 // pred_fallthru
      _
    %p952 = scmp.le.s32.totalorder 2, %s11
    // Predicated region
    $region45: #{ensemble_forward.1} parent=5 // pred_check
      %p953 = pneg %p952
    $region46: #{ensemble_forward.1} parent=5 // pred_check_branch
      %955 = sbr.rel (%p953) target = $region48
    $region47: #{ensemble_forward.1} parent=5 // pred_region
      %s956 = ssub.s32 %s11, 2
      // Predicated region
      $region49: #{ensemble_forward.1} parent=47 // pred_check
        %p957 = pneg %p150
      $region50: #{ensemble_forward.1} parent=47 // pred_check_branch
        %959 = sbr.rel (%p957) target = $region52
      $region51: #{ensemble_forward.1} parent=47 // pred_region
        %p960 = scmp.lt.s32.totalorder %s17, 1
        %s961 = scalar_select %p960, %s17, 1
        %s962 = smul.addr %s961, 4
        %s963 = scalar_lea.vmem %s5, %s962
      $region52: #{ensemble_forward.1} parent=47 // pred_fallthru
        _
    $region48: #{ensemble_forward.1} parent=5 // pred_fallthru
      _
  $region6: #{ensemble_forward.1} parent=0 // loop_footer
    %s15 = sadd.s32 1, %s11
  $region7: #{ensemble_forward.1} parent=0 // loop_footer_branch
    %10 = sbr.rel target = $region3
  $region8: #{ensemble_forward.1} parent=0 // loop_exit
    _

</llo_original>
